<compile_context>
chip_gen: v5e
topology: v5e:2x2
jax: 0.10.0
libtpu: 0.0.40
codegen_flags: <defaults>
</compile_context>

<pallas_src>
import math
import functools

import jax
import jax.numpy as jnp
from jax import lax
from jax.experimental import pallas as pl
from jax.experimental.pallas import tpu as pltpu

_LN_EPS = 1e-5
_NEG_INF = -1e9  # finite "masked" value (avoids NaN if a row were fully masked)

# Contract the LAST dim of both operands: x:(M,K) . w:(N,K) -> (M,N).
# Keeps PyTorch weight layout and avoids a materialized transpose.
_DN_NT = (((1,), (1,)), ((), ()))


def _pick_tile(dim, targets):
    """Largest target that evenly divides `dim`, else the full dim (small shapes)."""
    for t in targets:
        if dim >= t and dim % t == 0:
            return t
    return dim


# ----------------------------------------------------------------------------
# Tiled linear:  y = (x @ w.T + b) [* scale] [relu]   (bf16 MXU, f32 accumulate)
# ----------------------------------------------------------------------------
def _linear_kernel(x_ref, w_ref, b_ref, o_ref, acc_ref, *, activation, scale):
    @pl.when(pl.program_id(2) == 0)
    def _():
        acc_ref[...] = jnp.zeros_like(acc_ref)

    acc_ref[...] += lax.dot_general(
        x_ref[...].astype(jnp.bfloat16), w_ref[...],
        dimension_numbers=_DN_NT, preferred_element_type=jnp.float32)

    @pl.when(pl.program_id(2) == pl.num_programs(2) - 1)
    def _():
        y = acc_ref[...] + b_ref[...]
        if scale is not None:
            y = y * scale
        if activation == "relu":
            y = jnp.maximum(y, 0.0)
        o_ref[...] = y.astype(o_ref.dtype)


def linear(x2d, w, b, activation=None, scale=None, out_dtype=jnp.float32):
    """x2d: (M, K); w: (N, K) [PyTorch layout]; b: (N,) -> (M, N)."""
    M, K = x2d.shape
    N = w.shape[0]
    tm = _pick_tile(M, (256, 128))
    tn = _pick_tile(N, (256, 128))
    tk = _pick_tile(K, (512, 256, 128))
    # TODO(synk): for repeated inference the bf16 weight copies should be
    # materialized once outside the forward instead of per call.
    return pl.pallas_call(
        functools.partial(_linear_kernel, activation=activation, scale=scale),
        grid=(M // tm, N // tn, K // tk),
        out_shape=jax.ShapeDtypeStruct((M, N), out_dtype),
        in_specs=[
            pl.BlockSpec((tm, tk), lambda i, j, k: (i, k)),
            pl.BlockSpec((tn, tk), lambda i, j, k: (j, k)),
            pl.BlockSpec((1, tn), lambda i, j, k: (0, j)),
        ],
        out_specs=pl.BlockSpec((tm, tn), lambda i, j, k: (i, j)),
        scratch_shapes=[pltpu.VMEM((tm, tn), jnp.float32)],
        compiler_params=pltpu.CompilerParams(
            dimension_semantics=("parallel", "parallel", "arbitrary")),
    )(x2d, w.astype(jnp.bfloat16), b.reshape(1, N))


# ----------------------------------------------------------------------------
# Plain LayerNorm (final encoder / decoder norms)
# ----------------------------------------------------------------------------
def _ln_kernel(x_ref, g_ref, b_ref, o_ref, *, eps):
    z = x_ref[...]
    mean = jnp.mean(z, axis=-1, keepdims=True)
    var = jnp.mean((z - mean) ** 2, axis=-1, keepdims=True)
    inv = lax.rsqrt(var + eps)
    o_ref[...] = ((z - mean) * inv * g_ref[...] + b_ref[...]).astype(o_ref.dtype)


def layernorm(x2d, gamma, beta):
    M, D = x2d.shape
    # 512-row cap keeps VMEM safe on v7x; on v6e, 1024 gets ~1% more HBM roofline.
    tm = _pick_tile(M, (512, 256, 128))
    row_spec = pl.BlockSpec((tm, D), lambda i: (i, 0))
    vec_spec = pl.BlockSpec((1, D), lambda i: (0, 0))
    return pl.pallas_call(
        functools.partial(_ln_kernel, eps=_LN_EPS),
        grid=(M // tm,),
        out_shape=jax.ShapeDtypeStruct((M, D), jnp.float32),
        in_specs=[row_spec, vec_spec, vec_spec],
        out_specs=row_spec,
        compiler_params=pltpu.CompilerParams(dimension_semantics=("parallel",)),
    )(x2d, gamma, beta)


# ----------------------------------------------------------------------------
# Fused attention out-projection + residual add + LayerNorm:
#     LayerNorm(residual + attn @ Wo.T + bo)
# ----------------------------------------------------------------------------
def _outproj_ln_kernel(a_ref, res_ref, w_ref, b_ref, g_ref, be_ref, o_ref, *, eps):
    y = lax.dot_general(a_ref[...].astype(jnp.bfloat16), w_ref[...],
                        dimension_numbers=_DN_NT,
                        preferred_element_type=jnp.float32) + b_ref[...]
    z = res_ref[...] + y
    mean = jnp.mean(z, axis=-1, keepdims=True)
    var = jnp.mean((z - mean) ** 2, axis=-1, keepdims=True)
    inv = lax.rsqrt(var + eps)
    o_ref[...] = ((z - mean) * inv * g_ref[...] + be_ref[...]).astype(o_ref.dtype)


def outproj_add_ln(attn2d, res2d, w, b, gamma, beta):
    """attn2d: (M, D) bf16/f32; res2d: (M, D) f32; w: (D, D) -> (M, D) f32."""
    M, D = res2d.shape
    tm = _pick_tile(M, (256, 128))
    row_spec = pl.BlockSpec((tm, D), lambda i: (i, 0))
    vec_spec = pl.BlockSpec((1, D), lambda i: (0, 0))
    # TODO(synk): for very large D, tile the (D, D) weight along N/K instead of
    # keeping it fully VMEM-resident; fine at typical d_model sizes.
    return pl.pallas_call(
        functools.partial(_outproj_ln_kernel, eps=_LN_EPS),
        grid=(M // tm,),
        out_shape=jax.ShapeDtypeStruct((M, D), jnp.float32),
        in_specs=[
            row_spec,                                   # attention output
            row_spec,                                   # residual
            pl.BlockSpec((D, D), lambda i: (0, 0)),     # weight stays resident
            vec_spec, vec_spec, vec_spec,
        ],
        out_specs=row_spec,
        compiler_params=pltpu.CompilerParams(dimension_semantics=("parallel",)),
    )(attn2d, res2d, w.astype(jnp.bfloat16), b.reshape(1, D), gamma, beta)


# ----------------------------------------------------------------------------
# Fused FFN block:  LayerNorm(x + linear2(relu(linear1(x))))
# ----------------------------------------------------------------------------
def _ffn_kernel(x_ref, w1_ref, b1_ref, w2_ref, b2_ref, g_ref, be_ref, o_ref, *, eps):
    x = x_ref[...]
    h = lax.dot_general(x.astype(jnp.bfloat16), w1_ref[...],
                        dimension_numbers=_DN_NT,
                        preferred_element_type=jnp.float32) + b1_ref[...]
    h = jnp.maximum(h, 0.0).astype(jnp.bfloat16)   # bf16 intermediate: bounds VMEM + 2x MXU
    y = lax.dot_general(h, w2_ref[...], dimension_numbers=_DN_NT,
                        preferred_element_type=jnp.float32) + b2_ref[...]
    z = x + y                                      # residual
    mean = jnp.mean(z, axis=-1, keepdims=True)
    var = jnp.mean((z - mean) ** 2, axis=-1, keepdims=True)
    inv = lax.rsqrt(var + eps)
    o_ref[...] = ((z - mean) * inv * g_ref[...] + be_ref[...]).astype(o_ref.dtype)


def ffn_block(x2d, w1, b1, w2, b2, gamma, beta):
    M, D = x2d.shape
    dff = w1.shape[0]
    tm = _pick_tile(M, (256, 128))
    row_spec = pl.BlockSpec((tm, D), lambda i: (i, 0))
    # TODO(synk): on v7x single-buffer the resident weight specs
    # (pipeline_mode=pl.Buffered(1)) or tile dff as an accumulated grid axis;
    # default double-buffering doubles resident-weight VMEM.
    return pl.pallas_call(
        functools.partial(_ffn_kernel, eps=_LN_EPS),
        grid=(M // tm,),
        out_shape=jax.ShapeDtypeStruct((M, D), jnp.float32),
        in_specs=[
            row_spec,
            pl.BlockSpec((dff, D), lambda i: (0, 0)),   # weights stay resident
            pl.BlockSpec((1, dff), lambda i: (0, 0)),
            pl.BlockSpec((D, dff), lambda i: (0, 0)),
            pl.BlockSpec((1, D), lambda i: (0, 0)),
            pl.BlockSpec((1, D), lambda i: (0, 0)),
            pl.BlockSpec((1, D), lambda i: (0, 0)),
        ],
        out_specs=row_spec,
        compiler_params=pltpu.CompilerParams(dimension_semantics=("parallel",)),
    )(x2d, w1.astype(jnp.bfloat16), b1.reshape(1, dff),
      w2.astype(jnp.bfloat16), b2.reshape(1, D), gamma, beta)


# ----------------------------------------------------------------------------
# Attention: one grid step per batch element, all heads packed into the block.
# q/k/v are read straight out of the stacked projection arrays through the
# BlockSpec index_map (no HBM slice copies).
# ----------------------------------------------------------------------------
def _attn_kernel(*refs, scale, masked):
    if masked:
        q_ref, k_ref, v_ref, mask_ref, o_ref = refs
    else:
        q_ref, k_ref, v_ref, o_ref = refs

    q = (q_ref[0, 0] * scale).astype(jnp.bfloat16)   # (H, Lq, Dh), scale smaller operand
    k = k_ref[0, 0].astype(jnp.bfloat16)             # (H, Lk, Dh)
    v = v_ref[0, 0].astype(jnp.bfloat16)             # (H, Lk, Dh)

    s = jnp.einsum("hqd,hkd->hqk", q, k, preferred_element_type=jnp.float32)
    if masked:
        s = s + mask_ref[...][None, :, :]
    m = jnp.max(s, axis=-1, keepdims=True)
    p = jnp.exp(s - m)
    denom = jnp.sum(p, axis=-1, keepdims=True)
    p = (p / denom).astype(jnp.bfloat16)             # exact divide (review note)
    o = jnp.einsum("hqk,hkd->hqd", p, v, preferred_element_type=jnp.float32)
    o_ref[0] = o.astype(o_ref.dtype)


def _stack_spec(sel, H, L, Dh):
    # Picks slab `sel` of a (S, B, H, L, Dh) stacked projection array.
    return pl.BlockSpec((1, 1, H, L, Dh), lambda b: (sel, b, 0, 0, 0))


def scaled_dot_product_attention(q_arr, q_sel, kv_arr, k_sel, v_sel, mask=None):
    """q_arr: (Sq, B, H, Lq, Dh); kv_arr: (Skv, B, H, Lk, Dh); mask: (Lq, Lk) additive."""
    _, B, H, Lq, Dh = q_arr.shape
    Lk = kv_arr.shape[3]
    scale = 1.0 / math.sqrt(Dh)
    in_specs = [_stack_spec(q_sel, H, Lq, Dh),
                _stack_spec(k_sel, H, Lk, Dh),
                _stack_spec(v_sel, H, Lk, Dh)]
    args = [q_arr, kv_arr, kv_arr]
    if mask is not None:
        in_specs.append(pl.BlockSpec((Lq, Lk), lambda b: (0, 0)))
        args.append(mask)
    # TODO(synk): for long sequences (and v7x's 64 MiB VMEM) tile Lk flash-style
    # with online-softmax scratch; at these sizes the whole block fits VMEM.
    return pl.pallas_call(
        functools.partial(_attn_kernel, scale=scale, masked=mask is not None),
        grid=(B,),
        out_shape=jax.ShapeDtypeStruct((B, H, Lq, Dh), jnp.bfloat16),
        in_specs=in_specs,
        out_specs=pl.BlockSpec((1, H, Lq, Dh), lambda b: (b, 0, 0, 0)),
        compiler_params=pltpu.CompilerParams(dimension_semantics=("parallel",)),
    )(*args)


# ----------------------------------------------------------------------------
# Transformer building blocks (glue in JAX, compute in Pallas)
# ----------------------------------------------------------------------------
def multihead_attention(query, key, p, nhead, mask=None, self_attention=False):
    """query: (Lq, B, D); key(=value): (Lk, B, D) -> attention output (Lq*B, D) bf16.
    The out-projection is fused downstream (outproj_add_ln)."""
    Lq, B, D = query.shape
    Lk = key.shape[0]
    Dh = D // nhead
    w_in, b_in = p["in_proj_weight"], p["in_proj_bias"]

    if self_attention:
        # One fused (M, D) x (3D, D) projection; single relayout to head-major.
        qkv = linear(query.reshape(Lq * B, D), w_in, b_in, out_dtype=jnp.bfloat16)
        qkv = jnp.transpose(qkv.reshape(Lq, B, 3, nhead, Dh), (2, 1, 3, 0, 4))
        q_arr, kv_arr = qkv, qkv                       # (3, B, H, Lq, Dh)
        q_sel, k_sel, v_sel = 0, 1, 2
    else:
        # Cross-attention: query projection + fused K/V projection.
        q = linear(query.reshape(Lq * B, D), w_in[:D], b_in[:D], out_dtype=jnp.bfloat16)
        q_arr = jnp.transpose(q.reshape(Lq, B, 1, nhead, Dh), (2, 1, 3, 0, 4))
        kv = linear(key.reshape(Lk * B, D), w_in[D:], b_in[D:], out_dtype=jnp.bfloat16)
        kv_arr = jnp.transpose(kv.reshape(Lk, B, 2, nhead, Dh), (2, 1, 3, 0, 4))
        q_sel, k_sel, v_sel = 0, 0, 1

    out = scaled_dot_product_attention(q_arr, q_sel, kv_arr, k_sel, v_sel, mask)  # (B,H,Lq,Dh)
    # TODO(synk): this remaining relayout could be folded into the out-proj
    # kernel's in_spec if the kernel took (B, H, lq-tile, Dh) blocks; kept as a
    # single XLA transpose (bf16, half the bytes) for lowering safety.
    return jnp.transpose(out, (2, 0, 1, 3)).reshape(Lq * B, D)


def encoder_layer(x, p, nhead):
    L, B, D = x.shape
    x2d = x.reshape(L * B, D)
    sa = multihead_attention(x, x, p["self_attn"], nhead, self_attention=True)
    h = outproj_add_ln(sa, x2d, p["self_attn"]["out_proj_weight"],
                       p["self_attn"]["out_proj_bias"], p["norm1_w"], p["norm1_b"])
    h = ffn_block(h, p["linear1_w"], p["linear1_b"], p["linear2_w"],
                  p["linear2_b"], p["norm2_w"], p["norm2_b"])
    return h.reshape(L, B, D)


def decoder_layer(x, memory, p, nhead, tgt_mask):
    L, B, D = x.shape
    x2d = x.reshape(L * B, D)
    sa = multihead_attention(x, x, p["self_attn"], nhead, mask=tgt_mask,
                             self_attention=True)
    h2 = outproj_add_ln(sa, x2d, p["self_attn"]["out_proj_weight"],
                        p["self_attn"]["out_proj_bias"], p["norm1_w"], p["norm1_b"])
    ca = multihead_attention(h2.reshape(L, B, D), memory, p["cross_attn"], nhead,
                             self_attention=False)
    h3 = outproj_add_ln(ca, h2, p["cross_attn"]["out_proj_weight"],
                        p["cross_attn"]["out_proj_bias"], p["norm2_w"], p["norm2_b"])
    h = ffn_block(h3, p["linear1_w"], p["linear1_b"], p["linear2_w"],
                  p["linear2_b"], p["norm3_w"], p["norm3_b"])
    return h.reshape(L, B, D)


def make_positional_encoding(d_model, max_len=64):
    position = jnp.arange(max_len, dtype=jnp.float32)[:, None]
    div_term = jnp.exp(jnp.arange(0, d_model, 2, dtype=jnp.float32)
                       * (-math.log(10000.0) / d_model))
    pe = jnp.zeros((max_len, d_model), jnp.float32)
    pe = pe.at[:, 0::2].set(jnp.sin(position * div_term))
    pe = pe.at[:, 1::2].set(jnp.cos(position * div_term))
    return pe[:, None, :]  # (max_len, 1, d_model)


def transformer_forward(params, src, tgt, hidden_size, nhead):
    """src: (Ls, B, input_size); tgt: (Lt, B, output_size) -> (Lt, B, output_size)."""
    Ls, B, in_size = src.shape
    Lt, _, out_size = tgt.shape
    emb_scale = math.sqrt(hidden_size)

    # input projections, scaled by sqrt(d_model) as in the PyTorch module
    # (scale applies after the Linear, i.e. the bias is scaled too -- matches
    #  `self.src_fc(src) * math.sqrt(hidden_size)`)
    src_e = linear(src.reshape(Ls * B, in_size), params["src_fc_w"],
                   params["src_fc_b"], scale=emb_scale).reshape(Ls, B, hidden_size)
    tgt_e = linear(tgt.reshape(Lt * B, out_size), params["tgt_fc_w"],
                   params["tgt_fc_b"], scale=emb_scale).reshape(Lt, B, hidden_size)

    # positional encoding
    # TODO(synk): nn.Dropout is stochastic; modeled as eval-mode identity.
    pe = params["pe"]
    src_e = src_e + pe[:Ls]
    tgt_e = tgt_e + pe[:Lt]

    # encoder stack + final norm (nn.Transformer applies a final LayerNorm)
    memory = src_e
    for lp in params["enc_layers"]:
        memory = encoder_layer(memory, lp, nhead)
    memory = layernorm(memory.reshape(Ls * B, hidden_size),
                       params["enc_norm_w"], params["enc_norm_b"]
                       ).reshape(Ls, B, hidden_size)

    # causal mask for decoder self-attention (large finite negative, see review)
    rows = jnp.arange(Lt)[:, None]
    cols = jnp.arange(Lt)[None, :]
    tgt_mask = jnp.where(cols > rows, _NEG_INF, 0.0).astype(jnp.float32)

    out = tgt_e
    for lp in params["dec_layers"]:
        out = decoder_layer(out, memory, lp, nhead, tgt_mask)
    out2 = layernorm(out.reshape(Lt * B, hidden_size),
                     params["dec_norm_w"], params["dec_norm_b"])

    # TODO(synk): at demo scale the whole forward could be one fused pallas_call
    # (all weights < 200 KB); kept as tiled per-op kernels for production shapes.
    out2 = linear(out2, params["output_fc_w"], params["output_fc_b"])
    return out2.reshape(Lt, B, out_size)


# ----------------------------------------------------------------------------
# Deterministic parameter init (PyTorch weight layouts: (out_features, in_features))
# ----------------------------------------------------------------------------
def init_params(key, input_size, output_size, hidden, num_layers, nhead):
    dff = hidden * 2
    keys = iter(jax.random.split(key, 256))

    def w(shape):
        return jax.random.normal(next(keys), shape, jnp.float32) * 0.05

    zeros = lambda s: jnp.zeros(s, jnp.float32)
    ones = lambda s: jnp.ones(s, jnp.float32)

    def mha_params():
        return {
            "in_proj_weight": w((3 * hidden, hidden)),
            "in_proj_bias": zeros((3 * hidden,)),
            "out_proj_weight": w((hidden, hidden)),
            "out_proj_bias": zeros((hidden,)),
        }

    params = {
        "src_fc_w": w((hidden, input_size)), "src_fc_b": zeros((hidden,)),
        "tgt_fc_w": w((hidden, output_size)), "tgt_fc_b": zeros((hidden,)),
        "output_fc_w": w((output_size, hidden)), "output_fc_b": zeros((output_size,)),
        "pe": make_positional_encoding(hidden, max_len=64),
        "enc_norm_w": ones((1, hidden)), "enc_norm_b": zeros((1, hidden)),
        "dec_norm_w": ones((1, hidden)), "dec_norm_b": zeros((1, hidden)),
        "enc_layers": [], "dec_layers": [],
    }

    for _ in range(num_layers):
        params["enc_layers"].append({
            "self_attn": mha_params(),
            "linear1_w": w((dff, hidden)), "linear1_b": zeros((dff,)),
            "linear2_w": w((hidden, dff)), "linear2_b": zeros((hidden,)),
            "norm1_w": ones((1, hidden)), "norm1_b": zeros((1, hidden)),
            "norm2_w": ones((1, hidden)), "norm2_b": zeros((1, hidden)),
        })
    for _ in range(num_layers):
        params["dec_layers"].append({
            "self_attn": mha_params(),
            "cross_attn": mha_params(),
            "linear1_w": w((dff, hidden)), "linear1_b": zeros((dff,)),
            "linear2_w": w((hidden, dff)), "linear2_b": zeros((hidden,)),
            "norm1_w": ones((1, hidden)), "norm1_b": zeros((1, hidden)),
            "norm2_w": ones((1, hidden)), "norm2_b": zeros((1, hidden)),
            "norm3_w": ones((1, hidden)), "norm3_b": zeros((1, hidden)),
        })
    return params


# ----------------------------------------------------------------------------
if __name__ == "__main__":
    INPUT_SIZE, OUTPUT_SIZE = 8, 8
    HIDDEN, NUM_LAYERS, NHEAD = 32, 2, 4
    SEQ_SRC, SEQ_TGT, BATCH = 8, 8, 2

    key = jax.random.PRNGKey(0)
    kp, ks, kt = jax.random.split(key, 3)

    params = init_params(kp, INPUT_SIZE, OUTPUT_SIZE, HIDDEN, NUM_LAYERS, NHEAD)
    src = jax.random.normal(ks, (SEQ_SRC, BATCH, INPUT_SIZE), jnp.float32)
    tgt = jax.random.normal(kt, (SEQ_TGT, BATCH, OUTPUT_SIZE), jnp.float32)

    out = transformer_forward(params, src, tgt, HIDDEN, NHEAD)
    out = jax.block_until_ready(out)

    assert out.shape == (SEQ_TGT, BATCH, OUTPUT_SIZE), out.shape
    assert bool(jnp.all(jnp.isfinite(out)))
    print("KERNEL_OK")
</pallas_src>

<mosaic_0001>
module attributes {stable_mosaic.version = 11 : i64} {
  func.func @_linear_kernel(%arg0: i32, %arg1: i32, %arg2: i32, %arg3: memref<16x8xf32, #tpu.memory_space<vmem>>, %arg4: memref<32x8xbf16, #tpu.memory_space<vmem>>, %arg5: memref<1x32xf32, #tpu.memory_space<vmem>>, %arg6: memref<16x32xf32, #tpu.memory_space<vmem>>, %arg7: memref<16x32xf32, #tpu.memory_space<vmem>>) attributes {dimension_semantics = [#tpu.dimension_semantics<parallel>, #tpu.dimension_semantics<parallel>, #tpu.dimension_semantics<arbitrary>], iteration_bounds = array<i64: 1, 1, 1>, scalar_prefetch = 0 : i64, scratch_operands = 1 : i64, tpu.core_type = #tpu.core_type<tc>, window_params = [{transform_indices = @transform_0, window_bounds = array<i64: 16, 8>}, {transform_indices = @transform_1, window_bounds = array<i64: 32, 8>}, {transform_indices = @transform_2, window_bounds = array<i64: 1, 32>}, {transform_indices = @transform_3, window_bounds = array<i64: 16, 32>}]} {
    %c0_i32 = arith.constant 0 : i32
    %0 = arith.cmpi eq, %arg2, %c0_i32 : i32
    %1 = arith.extui %0 : i1 to i32
    %c0_i32_0 = arith.constant 0 : i32
    %2 = arith.cmpi ne, %1, %c0_i32_0 : i32
    scf.if %2 {
      %cst_10 = arith.constant 0.000000e+00 : f32
      %13 = vector.broadcast %cst_10 : f32 to vector<16x32xf32>
      %c0_11 = arith.constant 0 : index
      %c0_12 = arith.constant 0 : index
      %14 = vector.load %arg7[%c0_11, %c0_12] : memref<16x32xf32, #tpu.memory_space<vmem>>, vector<16x32xf32>
      tpu.vector_store %arg7[%c0_11, %c0_12], %13 {strides = array<i32>} : memref<16x32xf32, #tpu.memory_space<vmem>>, vector<16x32xf32>,
    } else {
    }
    %c0 = arith.constant 0 : index
    %c0_1 = arith.constant 0 : index
    %3 = vector.load %arg7[%c0, %c0_1] : memref<16x32xf32, #tpu.memory_space<vmem>>, vector<16x32xf32>
    %c0_2 = arith.constant 0 : index
    %c0_3 = arith.constant 0 : index
    %4 = vector.load %arg3[%c0_2, %c0_3] : memref<16x8xf32, #tpu.memory_space<vmem>>, vector<16x8xf32>
    %5 = arith.truncf %4 : vector<16x8xf32> to vector<16x8xbf16>
    %c0_4 = arith.constant 0 : index
    %c0_5 = arith.constant 0 : index
    %6 = vector.load %arg4[%c0_4, %c0_5] : memref<32x8xbf16, #tpu.memory_space<vmem>>, vector<32x8xbf16>
    %cst = arith.constant dense<0.000000e+00> : vector<16x32xf32>
    %7 = tpu.matmul %5, %6, %cst {dimension_numbers = #tpu.dot_dimension_numbers<[1], [1], [0], [0], [0, 0, 1, 0], [], []>} : vector<16x8xbf16>, vector<32x8xbf16>, vector<16x32xf32> -> vector<16x32xf32>
    %8 = arith.addf %3, %7 : vector<16x32xf32>
    %c0_6 = arith.constant 0 : index
    %c0_7 = arith.constant 0 : index
    %9 = vector.load %arg7[%c0_6, %c0_7] : memref<16x32xf32, #tpu.memory_space<vmem>>, vector<16x32xf32>
    tpu.vector_store %arg7[%c0_6, %c0_7], %8 {strides = array<i32>} : memref<16x32xf32, #tpu.memory_space<vmem>>, vector<16x32xf32>,
    %c0_i32_8 = arith.constant 0 : i32
    %10 = arith.cmpi eq, %arg2, %c0_i32_8 : i32
    %11 = arith.extui %10 : i1 to i32
    %c0_i32_9 = arith.constant 0 : i32
    %12 = arith.cmpi ne, %11, %c0_i32_9 : i32
    scf.if %12 {
      %c0_10 = arith.constant 0 : index
      %c0_11 = arith.constant 0 : index
      %13 = vector.load %arg7[%c0_10, %c0_11] : memref<16x32xf32, #tpu.memory_space<vmem>>, vector<16x32xf32>
      %c0_12 = arith.constant 0 : index
      %c0_13 = arith.constant 0 : index
      %14 = vector.load %arg5[%c0_12, %c0_13] : memref<1x32xf32, #tpu.memory_space<vmem>>, vector<1x32xf32>
      %15 = vector.broadcast %14 : vector<1x32xf32> to vector<16x32xf32>
      %16 = arith.addf %13, %15 : vector<16x32xf32>
      %cst_14 = arith.constant 5.65685415 : f32
      %17 = vector.broadcast %cst_14 : f32 to vector<16x32xf32>
      %18 = arith.mulf %16, %17 : vector<16x32xf32>
      %c0_15 = arith.constant 0 : index
      %c0_16 = arith.constant 0 : index
      %19 = vector.load %arg6[%c0_15, %c0_16] : memref<16x32xf32, #tpu.memory_space<vmem>>, vector<16x32xf32>
      tpu.vector_store %arg6[%c0_15, %c0_16], %18 {strides = array<i32>} : memref<16x32xf32, #tpu.memory_space<vmem>>, vector<16x32xf32>,
    } else {
    }
    return
  }
  func.func @transform_0(%arg0: i32, %arg1: i32, %arg2: i32) -> (i32, i32) {
    %c0_i32 = arith.constant 0 : i32
    return %arg0, %arg2 : i32, i32
  }
  func.func @transform_1(%arg0: i32, %arg1: i32, %arg2: i32) -> (i32, i32) {
    %c0_i32 = arith.constant 0 : i32
    return %arg1, %arg2 : i32, i32
  }
  func.func @transform_2(%arg0: i32, %arg1: i32, %arg2: i32) -> (i32, i32) {
    %c0_i32 = arith.constant 0 : i32
    %c0_i32_0 = arith.constant 0 : i32
    return %c0_i32, %arg1 : i32, i32
  }
  func.func @transform_3(%arg0: i32, %arg1: i32, %arg2: i32) -> (i32, i32) {
    %c0_i32 = arith.constant 0 : i32
    return %arg0, %arg1 : i32, i32
  }
}

</mosaic_0001>

<llo_original>
// kernel: tpu_custom_call.1
$region0: #{tpu_custom_call.1}
  #allocation0 [shape = 'u32[]', space=smem, size = 0x4, offset = 0x4, fixed_abs, tag = 'smem constant byte address 0x4 - core index']
  #allocation1 [shape = 'u32[72,128]{1,0:T(1,128)}', space=vmem, size = 0x9000, scoped, tag = 'internal scratch']
  #allocation2 [shape = 'f32[16,32]{1,0:T(8,128)}', space=vmem, size = 0x2000, scoped, tag = 'scratch operand']
  %s0 = inlined_call_operand.vmem [shape: f32[16,8], index: 0, kind: input, shape index: {}]
  %s1 = inlined_call_operand.vmem [shape: bf16[32,8], index: 1, kind: input, shape index: {}]
  %s2 = inlined_call_operand.vmem [shape: f32[1,32], index: 2, kind: input, shape index: {}]
  %s3 = inlined_call_operand.hbm [shape: f32[16,32], index: 3, kind: output, shape index: {}]
  %s4 = sld [smem:[#allocation0]]
  $region30: #{tpu_custom_call.1} parent=0
    _
  %s6 = ssub.s32 1, %s4
  %s7 = scalar_select 0, %s6, %s4
  $region1: #{tpu_custom_call.1} parent=0
    #allocation3 [shape = 'u8[8192]{0}', space=vmem, size = 0x2000, scoped, tag = 'output window, operand 0, single buffered']
    #allocation4 [shape = 's32[1]{0}', space=sflag, size = 0x4, scoped, tag = 'scoped memory for tpu_custom_call.1']
    %8 = vsyncpa [#allocation4], 0
    // Predicated region
    $region2: #{tpu_custom_call.1} parent=1 // pred_check
      _
    $region3: #{tpu_custom_call.1} parent=1 // pred_check_branch
      %10 = sbr.rel (0) target = $region5
    $region4: #{tpu_custom_call.1} parent=1 // pred_region
      _
    $region5: #{tpu_custom_call.1} parent=1 // pred_fallthru
      _
    // Predicated region
    $region6: #{tpu_custom_call.1} parent=1 // pred_check
      _
    $region7: #{tpu_custom_call.1} parent=1 // pred_check_branch
      %12 = sbr.rel (0) target = $region9
    $region8: #{tpu_custom_call.1} parent=1 // pred_region
      _
    $region9: #{tpu_custom_call.1} parent=1 // pred_fallthru
      _
    // Predicated region
    $region10: #{tpu_custom_call.1} parent=1 // pred_check
      _
    $region11: #{tpu_custom_call.1} parent=1 // pred_check_branch
      %14 = sbr.rel (0) target = $region13
    $region12: #{tpu_custom_call.1} parent=1 // pred_region
      _
    $region13: #{tpu_custom_call.1} parent=1 // pred_fallthru
      _
    %p16 = scmp.eq.s32.totalorder 0, 0
    // Predicated region
    $region14: #{tpu_custom_call.1} parent=1 // pred_check
      %p17 = pneg %p16
    $region15: #{tpu_custom_call.1} parent=1 // pred_check_branch
      %19 = sbr.rel (%p17) target = $region17
    $region16: #{tpu_custom_call.1} parent=1 // pred_region
      %vm20 = vcmask 261120
      %21 = vst.msk [vmem:[#allocation2] sm:$0xff] %vm20, 0.0
      %22 = vst.msk [vmem:[#allocation2 + $0x8] sm:$0xff] %vm20, 0.0
    $region17: #{tpu_custom_call.1} parent=1 // pred_fallthru
      _
    %v23 = vld [vmem:[#allocation2] sm:$0xff]
    %v24 = vld [vmem:[#allocation2 + $0x8] sm:$0xff]
    %v25 = vld [vmem:[%s0] sm:$0xff]
    %v26 = vld [vmem:[%s0 + $0x8] sm:$0xff]
    %v27 = vpack.c.bf16 %v26, %v25
    %v28 = vld [vmem:[%s1] sm:$0xf]
    %v29 = vld [vmem:[%s1 + $0x4] sm:$0xf]
    %v30 = vld [vmem:[%s1 + $0x8] sm:$0xf]
    %v31 = vld [vmem:[%s1 + $0xc] sm:$0xf]
    %v36 = vunpack.c.l.b16 %v28
    %v37 = vunpack.c.l.b16 %v29
    %v38 = vunpack.c.l.b16 %v30
    %v39 = vunpack.c.l.b16 %v31
    %v40 = vpack.c.b16 %v37, %v36
    %v41 = vpack.c.b16 %v39, %v38
    %vm42 = vcmask 64512
    %v44 = vsel %vm42, %v27, 0
    %v47 = vsel %vm42, %v40, 0
    %v50 = vsel %vm42, %v41, 0
    %52 = vmatpush.bf16.xpose.msra.mxu0 0
    %53 = vmatpush.bf16.xpose.msra.mxu0 0
    %54 = vmatpush.bf16.xpose.msra.mxu0 0
    %55 = vmatpush.bf16.xpose.msra.mxu0 0
    %56 = vmatpush.bf16.xpose.msra.mxu0 0
    %57 = vmatpush.bf16.xpose.msra.mxu0 0
    %58 = vmatpush.bf16.xpose.msra.mxu0 %v50
    %59 = vmatpush.bf16.xpose.msra.mxu0 %v47
    %60 = vmatmul.bf16.gmra.mxu0 %v44
    %v61 = vpop.f32.mrf.mxu0
    %v62 = vadd.f32 0.0, %v61
    %v63 = vpop.f32.mrf.mxu0
    %v64 = vadd.f32 0.0, %v63
    %65 = vdwg.mxu0
    %v66 = vadd.f32 %v23, %v62
    %v67 = vadd.f32 %v24, %v64
    %vm68 = vcmask 261120
    %69 = vst.msk [vmem:[#allocation2] sm:$0xff] %vm68, %v66
    %70 = vst.msk [vmem:[#allocation2 + $0x8] sm:$0xff] %vm68, %v67
    // Predicated region
    $region18: #{tpu_custom_call.1} parent=1 // pred_check
      %p71 = pneg %p16
    $region19: #{tpu_custom_call.1} parent=1 // pred_check_branch
      %73 = sbr.rel (%p71) target = $region21
    $region20: #{tpu_custom_call.1} parent=1 // pred_region
      %v74 = vld [vmem:[#allocation2] sm:$0xff]
      %v75 = vld [vmem:[#allocation2 + $0x8] sm:$0xff]
      %v76 = vld [vmem:[%s2] sm:$0x1]
      %v78 = vperm.slane %v76, 0
      %v80 = vadd.f32 %v74, %v78
      %v81 = vadd.f32 %v75, %v78
      %v82 = vmul.f32 %v80, 5.656854
      %v83 = vmul.f32 %v81, 5.656854
      %84 = vst.msk [vmem:[#allocation3] sm:$0xff] %vm68, %v82
      %85 = vst.msk [vmem:[#allocation3 + $0x8] sm:$0xff] %vm68, %v83
    $region21: #{tpu_custom_call.1} parent=1 // pred_fallthru
      _
    // Predicated region
    $region22: #{tpu_custom_call.1} parent=1 // pred_check
      _
    $region23: #{tpu_custom_call.1} parent=1 // pred_check_branch
      %87 = sbr.rel (0) target = $region25
    $region24: #{tpu_custom_call.1} parent=1 // pred_region
      %89 = vsyncadd [#allocation4], 0
      %s90 = sshll.u32 [#allocation3], 4
      %s91 = int_to_ptr.vmem [resolvable:$true] %s90
      %s92 = sshll.u32 %s3, 4
      %s93 = int_to_ptr.hbm [resolvable:$true] %s92
      %98 = dma.vmem_to_hbm [thread:$0]  %s91, 256, %s93, [#allocation4], 128, 128, 8
    $region25: #{tpu_custom_call.1} parent=1 // pred_fallthru
      _
    // Predicated region
    $region26: #{tpu_custom_call.1} parent=1 // pred_check
      _
    $region27: #{tpu_custom_call.1} parent=1 // pred_check_branch
      %100 = sbr.rel (0) target = $region29
    $region28: #{tpu_custom_call.1} parent=1 // pred_region
      %102 = dma.done [#allocation4], 256
    $region29: #{tpu_custom_call.1} parent=1 // pred_fallthru
      _
    %103 = vsyncpa [#allocation4], 1

</llo_original>
